<compile_context>
chip_gen: v7x
topology: tpu7x:2x2x1
jax: 0.10.0
libtpu: 0.0.40
codegen_flags: <defaults>
</compile_context>

<pallas_src>
import functools
from typing import NamedTuple

import jax
import jax.numpy as jnp
from jax.experimental import pallas as pl
from jax.experimental.pallas import tpu as pltpu

LANE = 128      # lane-dense hidden / output width quantum
ROWQ = 16       # bf16 packs 16 rows per vreg -> row-tile quantum
MAX_TM = 2048   # upper bound on the batch tile


def _round_up(x, m):
    return ((x + m - 1) // m) * m


def _pick_tile(batch):
    """Batch tile TM (multiple of 16) and padded batch.

    Keeps >=2 grid steps whenever the batch allows (so both v7x TensorCores
    get work), caps TM at MAX_TM, and sizes tiles to minimise last-tile
    padding waste."""
    b16 = _round_up(batch, ROWQ)
    n_tiles = max(1, pl.cdiv(b16, MAX_TM))
    if b16 >= 2 * ROWQ:
        n_tiles = max(n_tiles, 2)          # megacore: both TCs busy on v7x
    tm = _round_up(pl.cdiv(b16, n_tiles), ROWQ)
    tm = max(ROWQ, min(tm, MAX_TM))
    padded_batch = _round_up(batch, tm)
    return tm, padded_batch


def _resident_spec(block_shape, index_map):
    """BlockSpec for a VMEM-resident operand (constant index_map).

    Requests single buffering so the parameter stack isn't duplicated by the
    default double-buffering (matters when hidden size grows, esp. on v7x's
    64 MiB VMEM).  Falls back to the default pipeline mode if this JAX build
    doesn't expose pipeline_mode on BlockSpec."""
    try:
        return pl.BlockSpec(block_shape, index_map, pipeline_mode=pl.Buffered(1))
    except Exception:  # pragma: no cover - older/newer API without pipeline_mode
        return pl.BlockSpec(block_shape, index_map)


def _mlp_kernel(x_ref, w0_ref, wr_ref, b_ref, out_ref, *, n_layers):
    """One batch tile of the MLP.

    x_ref:   (TM, IN_PAD)      bf16  -- activation tile (pipelined over grid)
    w0_ref:  (IN_PAD, P)       bf16  -- layer-0 weight, VMEM-resident
    wr_ref:  (L-1, P, P)       bf16  -- layers 1..L-1 weights, VMEM-resident
    b_ref:   (L, P)            f32   -- all biases, VMEM-resident
    out_ref: (TM, P)           bf16  -- lane-dense output tile

    Hidden layers: y = relu(h @ W + b); final layer has no ReLU.
    bf16 MXU inputs, f32 accumulation, f32 VPU epilogue (bias + ReLU),
    bf16 store.
    """
    # Layer 0 (narrow K = IN_PAD).
    y = jnp.dot(x_ref[...], w0_ref[...],
                preferred_element_type=jnp.float32) + b_ref[0:1, :]
    h = jnp.maximum(y, 0.0).astype(jnp.bfloat16)

    # Layers 1..L-1 (unrolled at trace time, static indices).
    for layer in range(1, n_layers):
        w = wr_ref[layer - 1]                       # (P, P) bf16
        b = b_ref[layer:layer + 1, :]               # (1, P) f32
        y = jnp.dot(h, w, preferred_element_type=jnp.float32) + b
        if layer < n_layers - 1:
            h = jnp.maximum(y, 0.0).astype(jnp.bfloat16)
        else:
            out_ref[...] = y.astype(out_ref.dtype)  # bf16 store


class PackedParams(NamedTuple):
    w0: jax.Array       # (IN_PAD, P) bf16
    w_rest: jax.Array   # (L-1, P, P) bf16
    b: jax.Array        # (L, P)      f32


def prepare_params(weights, biases):
    """One-time (per model) padding / stacking / bf16 cast of the parameters.

    weights[i]: (in_i, out_i) f32 (already W_pt.T), biases[i]: (out_i,) f32.
    Returns (PackedParams, final_out).  Call once; reuse across forwards.
    """
    n_layers = len(weights)
    assert n_layers >= 2, "module always has at least first + final Linear"
    in_dim = weights[0].shape[0]
    final_out = weights[-1].shape[1]

    in_pad = _round_up(in_dim, ROWQ)
    # Common lane-dense width for hidden activations and the final output.
    dims = [w.shape[1] for w in weights] + [w.shape[0] for w in weights[1:]]
    P = max(_round_up(d, LANE) for d in dims)

    w0 = jnp.pad(weights[0], ((0, in_pad - in_dim),
                              (0, P - weights[0].shape[1]))).astype(jnp.bfloat16)
    w_rest = jnp.stack([
        jnp.pad(w, ((0, P - w.shape[0]), (0, P - w.shape[1])))
        for w in weights[1:]
    ]).astype(jnp.bfloat16)
    b_stack = jnp.stack([
        jnp.pad(b.reshape(-1), (0, P - b.shape[-1])) for b in biases
    ]).astype(jnp.float32)

    return PackedParams(w0, w_rest, b_stack), final_out


@functools.partial(jax.jit, static_argnames=("n_outputs", "final_out"))
def fully_connected_multi_output(x, params, n_outputs, final_out):
    """x: (B, input_size) f32; params from prepare_params.
    Returns (B, output_size, n_outputs) f32 — same semantics as the PyTorch
    module's forward()."""
    w0, w_rest, b_stack = params
    batch, in_features = x.shape
    in_pad, P = w0.shape
    n_layers = int(w_rest.shape[0]) + 1

    tm, padded_batch = _pick_tile(batch)
    grid = (padded_batch // tm,)

    # Narrow, bf16 input tile (no 128-lane padding of the feature dim).
    x_pad = jnp.pad(x.astype(jnp.bfloat16),
                    ((0, padded_batch - batch), (0, in_pad - in_features)))

    # VMEM budget: pipelined x/out tiles + resident params (+1 buffer slack)
    # + live f32 intermediates.  Re-derived whenever TM / dtypes change.
    est = (2 * tm * in_pad * 2                      # x tile, double-buffered
           + 2 * tm * P * 2                         # bf16 out tile, double-buffered
           + 2 * (w0.size * 2 + w_rest.size * 2 + b_stack.size * 4)
           + 4 * tm * P * 4)                        # f32 intermediates
    vmem_limit = int(min(48 << 20, max(est, 4 << 20)))

    kernel = functools.partial(_mlp_kernel, n_layers=n_layers)

    out2d = pl.pallas_call(
        kernel,
        out_shape=jax.ShapeDtypeStruct((padded_batch, P), jnp.bfloat16),
        grid=grid,
        in_specs=[
            pl.BlockSpec((tm, in_pad), lambda i: (i, 0)),         # x: batch-tiled
            _resident_spec((in_pad, P), lambda i: (0, 0)),        # layer-0 weight
            _resident_spec((n_layers - 1, P, P),
                           lambda i: (0, 0, 0)),                  # stacked weights
            _resident_spec((n_layers, P), lambda i: (0, 0)),      # stacked biases
        ],
        out_specs=pl.BlockSpec((tm, P), lambda i: (i, 0)),        # lane-dense out
        compiler_params=pltpu.CompilerParams(
            dimension_semantics=("parallel",),     # megacore sharding on v7x
            vmem_limit_bytes=vmem_limit,
        ),
        cost_estimate=pl.CostEstimate(
            flops=2 * padded_batch * (in_pad * P + (n_layers - 1) * P * P),
            transcendentals=0,
            bytes_accessed=(x_pad.size * 2 + w0.size * 2 + w_rest.size * 2
                            + b_stack.size * 4 + padded_batch * P * 2),
        ),
    )(x_pad, w0, w_rest, b_stack)

    # Strip batch/lane padding, upcast, then the PyTorch .reshape(B,-1,n_outputs).
    return (out2d[:batch, :final_out].astype(jnp.float32)
            .reshape(batch, -1, n_outputs))


def init_params(key, input_size, output_size, hidden_size, n_hidden_layers,
                n_outputs):
    """PyTorch-Linear-style init (U[-1/sqrt(fan_in), 1/sqrt(fan_in)]).
    Weights returned as (in_features, out_features) = W_pt.T, biases as (out,)."""
    dims = [input_size] + [hidden_size] * (n_hidden_layers + 1) \
           + [output_size * n_outputs]
    weights, biases = [], []
    for i in range(len(dims) - 1):
        fan_in, fan_out = dims[i], dims[i + 1]
        key, kw, kb = jax.random.split(key, 3)
        bound = 1.0 / (fan_in ** 0.5)
        weights.append(jax.random.uniform(kw, (fan_in, fan_out), jnp.float32,
                                          minval=-bound, maxval=bound))
        biases.append(jax.random.uniform(kb, (fan_out,), jnp.float32,
                                         minval=-bound, maxval=bound))
    return weights, biases


def reference_forward_f32(x, weights, biases, n_outputs):
    """Pure-f32 reference matching the PyTorch module semantics."""
    h = x
    for i, (w, b) in enumerate(zip(weights, biases)):
        h = h @ w + b.reshape(1, -1)
        if i < len(weights) - 1:
            h = jnp.maximum(h, 0.0)
    return h.reshape(x.shape[0], -1, n_outputs)


def reference_forward_mixed(x, weights, biases, n_outputs):
    """Plain-JAX reference with the kernel's bf16-in / f32-acc / bf16-out numerics."""
    h = x.astype(jnp.bfloat16)
    for i, (w, b) in enumerate(zip(weights, biases)):
        y = jnp.dot(h, w.astype(jnp.bfloat16),
                    preferred_element_type=jnp.float32) + b.reshape(1, -1)
        if i < len(weights) - 1:
            h = jnp.maximum(y, 0.0).astype(jnp.bfloat16)
        else:
            h = y.astype(jnp.bfloat16).astype(jnp.float32)   # kernel stores bf16
    return h.reshape(x.shape[0], -1, n_outputs)


if __name__ == "__main__":
    # Hyperparameters consistent with the docs example (x = rand(20, 5)).
    input_size = 5
    output_size = 7
    hidden_size = 32
    n_hidden_layers = 2
    n_outputs = 3
    batch = 20

    key = jax.random.PRNGKey(0)
    key, kx = jax.random.split(key)
    x = jax.random.uniform(kx, (batch, input_size), jnp.float32)

    weights, biases = init_params(key, input_size, output_size, hidden_size,
                                  n_hidden_layers, n_outputs)

    # Parameter padding / stacking is hoisted out of the per-forward path.
    params, final_out = prepare_params(weights, biases)

    out = fully_connected_multi_output(x, params, n_outputs, final_out)
    out = jax.block_until_ready(out)

    assert out.shape == (batch, output_size, n_outputs), out.shape

    # Check against a reference with identical mixed-precision numerics
    # (tolerance covers one bf16 ulp of accumulation-order difference).
    ref_mixed = reference_forward_mixed(x, weights, biases, n_outputs)
    assert jnp.allclose(out, ref_mixed, atol=2e-2, rtol=2e-2), \
        float(jnp.max(jnp.abs(out - ref_mixed)))

    # Semantics check against the pure-f32 PyTorch-equivalent forward
    # (loose tolerance accounts for bf16 matmul inputs and bf16 output store).
    ref_f32 = reference_forward_f32(x, weights, biases, n_outputs)
    assert jnp.allclose(out, ref_f32, atol=6e-2, rtol=6e-2), \
        float(jnp.max(jnp.abs(out - ref_f32)))

    print("KERNEL_OK")
</pallas_src>

<mosaic_0001>
module attributes {stable_mosaic.version = 11 : i64} {
  func.func @_mlp_kernel(%arg0: i32, %arg1: memref<16x16xbf16, #tpu.memory_space<vmem>>, %arg2: memref<16x128xbf16, #tpu.memory_space<vmem>>, %arg3: memref<3x128x128xbf16, #tpu.memory_space<vmem>>, %arg4: memref<4x128xf32, #tpu.memory_space<vmem>>, %arg5: memref<16x128xbf16, #tpu.memory_space<vmem>>) attributes {dimension_semantics = [#tpu.dimension_semantics<parallel>], iteration_bounds = array<i64: 2>, scalar_prefetch = 0 : i64, scratch_operands = 0 : i64, tpu.core_type = #tpu.core_type<tc>, window_params = [{transform_indices = @transform_0, window_bounds = array<i64: 16, 16>}, {pipeline_mode = #tpu.pipeline_mode<synchronous>, transform_indices = @transform_1, window_bounds = array<i64: 16, 128>}, {pipeline_mode = #tpu.pipeline_mode<synchronous>, transform_indices = @transform_2, window_bounds = array<i64: 3, 128, 128>}, {pipeline_mode = #tpu.pipeline_mode<synchronous>, transform_indices = @transform_3, window_bounds = array<i64: 4, 128>}, {transform_indices = @transform_4, window_bounds = array<i64: 16, 128>}]} {
    %c0 = arith.constant 0 : index
    %c0_0 = arith.constant 0 : index
    %0 = vector.load %arg1[%c0, %c0_0] : memref<16x16xbf16, #tpu.memory_space<vmem>>, vector<16x16xbf16>
    %c0_1 = arith.constant 0 : index
    %c0_2 = arith.constant 0 : index
    %1 = vector.load %arg2[%c0_1, %c0_2] : memref<16x128xbf16, #tpu.memory_space<vmem>>, vector<16x128xbf16>
    %cst = arith.constant dense<0.000000e+00> : vector<16x128xf32>
    %2 = tpu.matmul %0, %1, %cst {dimension_numbers = #tpu.dot_dimension_numbers<[1], [0], [0], [1], [0, 0, 1, 1], [], []>} : vector<16x16xbf16>, vector<16x128xbf16>, vector<16x128xf32> -> vector<16x128xf32>
    %c0_3 = arith.constant 0 : index
    %c0_4 = arith.constant 0 : index
    %3 = vector.load %arg4[%c0_3, %c0_4] : memref<4x128xf32, #tpu.memory_space<vmem>>, vector<1x128xf32>
    %4 = vector.broadcast %3 : vector<1x128xf32> to vector<16x128xf32>
    %5 = arith.addf %2, %4 : vector<16x128xf32>
    %cst_5 = arith.constant 0.000000e+00 : f32
    %6 = vector.broadcast %cst_5 : f32 to vector<16x128xf32>
    %7 = arith.maximumf %5, %6 : vector<16x128xf32>
    %8 = arith.truncf %7 : vector<16x128xf32> to vector<16x128xbf16>
    %c0_6 = arith.constant 0 : index
    %c0_7 = arith.constant 0 : index
    %c0_8 = arith.constant 0 : index
    %9 = vector.load %arg3[%c0_6, %c0_7, %c0_8] : memref<3x128x128xbf16, #tpu.memory_space<vmem>>, vector<1x128x128xbf16>
    %10 = vector.shape_cast %9 : vector<1x128x128xbf16> to vector<128x128xbf16>
    %c1 = arith.constant 1 : index
    %c0_9 = arith.constant 0 : index
    %11 = vector.load %arg4[%c1, %c0_9] : memref<4x128xf32, #tpu.memory_space<vmem>>, vector<1x128xf32>
    %cst_10 = arith.constant dense<0.000000e+00> : vector<16x128xf32>
    %12 = tpu.matmul %8, %10, %cst_10 {dimension_numbers = #tpu.dot_dimension_numbers<[1], [0], [0], [1], [0, 0, 1, 1], [], []>} : vector<16x128xbf16>, vector<128x128xbf16>, vector<16x128xf32> -> vector<16x128xf32>
    %13 = vector.broadcast %11 : vector<1x128xf32> to vector<16x128xf32>
    %14 = arith.addf %12, %13 : vector<16x128xf32>
    %cst_11 = arith.constant 0.000000e+00 : f32
    %15 = vector.broadcast %cst_11 : f32 to vector<16x128xf32>
    %16 = arith.maximumf %14, %15 : vector<16x128xf32>
    %17 = arith.truncf %16 : vector<16x128xf32> to vector<16x128xbf16>
    %c1_12 = arith.constant 1 : index
    %c0_13 = arith.constant 0 : index
    %c0_14 = arith.constant 0 : index
    %18 = vector.load %arg3[%c1_12, %c0_13, %c0_14] : memref<3x128x128xbf16, #tpu.memory_space<vmem>>, vector<1x128x128xbf16>
    %19 = vector.shape_cast %18 : vector<1x128x128xbf16> to vector<128x128xbf16>
    %c2 = arith.constant 2 : index
    %c0_15 = arith.constant 0 : index
    %20 = vector.load %arg4[%c2, %c0_15] : memref<4x128xf32, #tpu.memory_space<vmem>>, vector<1x128xf32>
    %cst_16 = arith.constant dense<0.000000e+00> : vector<16x128xf32>
    %21 = tpu.matmul %17, %19, %cst_16 {dimension_numbers = #tpu.dot_dimension_numbers<[1], [0], [0], [1], [0, 0, 1, 1], [], []>} : vector<16x128xbf16>, vector<128x128xbf16>, vector<16x128xf32> -> vector<16x128xf32>
    %22 = vector.broadcast %20 : vector<1x128xf32> to vector<16x128xf32>
    %23 = arith.addf %21, %22 : vector<16x128xf32>
    %cst_17 = arith.constant 0.000000e+00 : f32
    %24 = vector.broadcast %cst_17 : f32 to vector<16x128xf32>
    %25 = arith.maximumf %23, %24 : vector<16x128xf32>
    %26 = arith.truncf %25 : vector<16x128xf32> to vector<16x128xbf16>
    %c2_18 = arith.constant 2 : index
    %c0_19 = arith.constant 0 : index
    %c0_20 = arith.constant 0 : index
    %27 = vector.load %arg3[%c2_18, %c0_19, %c0_20] : memref<3x128x128xbf16, #tpu.memory_space<vmem>>, vector<1x128x128xbf16>
    %28 = vector.shape_cast %27 : vector<1x128x128xbf16> to vector<128x128xbf16>
    %c3 = arith.constant 3 : index
    %c0_21 = arith.constant 0 : index
    %29 = vector.load %arg4[%c3, %c0_21] : memref<4x128xf32, #tpu.memory_space<vmem>>, vector<1x128xf32>
    %cst_22 = arith.constant dense<0.000000e+00> : vector<16x128xf32>
    %30 = tpu.matmul %26, %28, %cst_22 {dimension_numbers = #tpu.dot_dimension_numbers<[1], [0], [0], [1], [0, 0, 1, 1], [], []>} : vector<16x128xbf16>, vector<128x128xbf16>, vector<16x128xf32> -> vector<16x128xf32>
    %31 = vector.broadcast %29 : vector<1x128xf32> to vector<16x128xf32>
    %32 = arith.addf %30, %31 : vector<16x128xf32>
    %33 = arith.truncf %32 : vector<16x128xf32> to vector<16x128xbf16>
    %c0_23 = arith.constant 0 : index
    %c0_24 = arith.constant 0 : index
    %34 = vector.load %arg5[%c0_23, %c0_24] : memref<16x128xbf16, #tpu.memory_space<vmem>>, vector<16x128xbf16>
    tpu.vector_store %arg5[%c0_23, %c0_24], %33 {strides = array<i32>} : memref<16x128xbf16, #tpu.memory_space<vmem>>, vector<16x128xbf16>,
    return
  }
  func.func @transform_0(%arg0: i32) -> (i32, i32) {
    %c0_i32 = arith.constant 0 : i32
    %c0_i32_0 = arith.constant 0 : i32
    return %arg0, %c0_i32 : i32, i32
  }
  func.func @transform_1(%arg0: i32) -> (i32, i32) {
    %c0_i32 = arith.constant 0 : i32
    %c0_i32_0 = arith.constant 0 : i32
    %c0_i32_1 = arith.constant 0 : i32
    return %c0_i32, %c0_i32_0 : i32, i32
  }
  func.func @transform_2(%arg0: i32) -> (i32, i32, i32) {
    %c0_i32 = arith.constant 0 : i32
    %c0_i32_0 = arith.constant 0 : i32
    %c0_i32_1 = arith.constant 0 : i32
    %c0_i32_2 = arith.constant 0 : i32
    return %c0_i32, %c0_i32_0, %c0_i32_1 : i32, i32, i32
  }
  func.func @transform_3(%arg0: i32) -> (i32, i32) {
    %c0_i32 = arith.constant 0 : i32
    %c0_i32_0 = arith.constant 0 : i32
    %c0_i32_1 = arith.constant 0 : i32
    return %c0_i32, %c0_i32_0 : i32, i32
  }
  func.func @transform_4(%arg0: i32) -> (i32, i32) {
    %c0_i32 = arith.constant 0 : i32
    %c0_i32_0 = arith.constant 0 : i32
    return %arg0, %c0_i32 : i32, i32
  }
}

</mosaic_0001>

<llo_original>
// kernel: fully_connected_multi_output.1
$region0: #{fully_connected_multi_output.1}
  #allocation0 [shape = 'u32[]', space=smem, size = 0x4, offset = 0x4, fixed_abs, tag = 'smem constant byte address 0x4 - core index']
  #allocation1 [shape = 'u32[144,128]{1,0:T(1,128)}', space=vmem, size = 0x12000, scoped, tag = 'internal scratch']
  %s0 = inlined_call_operand.vmem [shape: bf16[32,16], index: 0, kind: input, shape index: {}]
  %s1 = inlined_call_operand.vmem [shape: bf16[16,128], index: 1, kind: input, shape index: {}]
  %s2 = inlined_call_operand.hbm [shape: bf16[3,128,128], index: 2, kind: input, shape index: {}]
  %s3 = inlined_call_operand.vmem [shape: f32[4,128], index: 3, kind: input, shape index: {}]
  %s4 = inlined_call_operand.vmem [shape: bf16[32,128], index: 4, kind: output, shape index: {}]
  %s5 = sld [smem:[#allocation0]]
  $region53: #{fully_connected_multi_output.1} parent=0
    _
  %s7 = ssub.s32 1, %s5
  %s8 = scalar_select 0, %s7, %s5
  $region1: #{fully_connected_multi_output.1} parent=0
    #allocation2 [shape = 'u8[98304]{0}', space=vmem, size = 0x18000, scoped, tag = 'input window, operand 2, single buffered']
    #allocation3 [shape = 's32[2]{0}', space=sflag, size = 0x8, scoped, tag = 'scoped memory for fully_connected_multi_output.1']
    %9 = vsyncpa [#allocation3], 0
    loop: start=0, step=1, limit=4
    $region2: #{fully_connected_multi_output.1} parent=1 // loop_pre_header
      _
    $region3: #{fully_connected_multi_output.1} parent=1 // loop_header
      %s11 = sphi 0, %s15
      %p12 = scmp.ge.s32.totalorder %s11, 4
      %s21 = sphi 0, %s23
      %s24 = sphi 0, %s21
      %s25 = sphi 0, %s24
      %s41 = sphi 0, %s25
      %s45 = sphi 0, %s45
      %s47 = sphi 0, %s45
      %s48 = sphi 0, %s47
      %s62 = sphi 0, %s48
      %s66 = sphi 0, %s66
      %s68 = sphi 0, %s66
      %s69 = sphi 0, %s68
      %s83 = sphi 0, %s69
      %s87 = sphi 0, %s87
      %s89 = sphi 0, %s87
      %s90 = sphi 0, %s89
      %s104 = sphi 0, %s90
      %s110 = sphi 0, %s112
      %s113 = sphi 0, %s110
      %s114 = sphi 0, %s113
      %s130 = sphi 0, %s114
    $region4: #{fully_connected_multi_output.1} parent=1 // loop_header_branch
      %14 = sbr.rel (%p12) target = $region8
    $region5: #{fully_connected_multi_output.1} parent=1 // loop_body
      %s16 = ssub.s32 %s11, 1
      %s17 = ssub.s32 %s11, 2
      %s18 = sadd.s32 %s11, 1
      %s19 = ssub.s32 %s11, %s18
      %p20 = scmp.eq.s32.totalorder %s19, 0
      %s22 = sadd.s32 %s21, 1
      %s23 = scalar_select %p20, %s21, %s22
      %p26 = pneg %p20
      %p27 = scmp.eq.s32.totalorder %s11, 1
      %p28 = por %p26, %p27
      %p29 = scmp.ne.s32.totalorder %s21, %s24
      %p30 = scmp.eq.s32.totalorder %s11, 0
      %p31 = por %p29, %p30
      %p32 = scmp.ne.s32.totalorder %s21, %s24
      %p33 = scmp.eq.s32.totalorder %s16, 1
      %p34 = por %p32, %p33
      %p35 = scmp.ne.s32.totalorder %s24, %s25
      %p36 = scmp.eq.s32.totalorder %s16, 0
      %p37 = por %p35, %p36
      %p38 = scmp.ne.s32.totalorder %s24, %s25
      %p39 = scmp.eq.s32.totalorder %s17, 1
      %p40 = por %p38, %p39
      %p42 = scmp.ne.s32.totalorder %s25, %s41
      %p43 = scmp.eq.s32.totalorder %s17, 0
      %p44 = por %p42, %p43
      %s46 = sadd.s32 %s45, 1
      %p49 = scmp.eq.s32.totalorder %s11, 1
      %p50 = scmp.ne.s32.totalorder %s45, %s47
      %p51 = scmp.eq.s32.totalorder %s11, 0
      %p52 = por %p50, %p51
      %p53 = scmp.ne.s32.totalorder %s45, %s47
      %p54 = scmp.eq.s32.totalorder %s16, 1
      %p55 = por %p53, %p54
      %p56 = scmp.ne.s32.totalorder %s47, %s48
      %p57 = scmp.eq.s32.totalorder %s16, 0
      %p58 = por %p56, %p57
      %p59 = scmp.ne.s32.totalorder %s47, %s48
      %p60 = scmp.eq.s32.totalorder %s17, 1
      %p61 = por %p59, %p60
      %p63 = scmp.ne.s32.totalorder %s48, %s62
      %p64 = scmp.eq.s32.totalorder %s17, 0
      %p65 = por %p63, %p64
      %s67 = sadd.s32 %s66, 1
      %p70 = scmp.eq.s32.totalorder %s11, 1
      %p71 = scmp.ne.s32.totalorder %s66, %s68
      %p72 = scmp.eq.s32.totalorder %s11, 0
      %p73 = por %p71, %p72
      %p74 = scmp.ne.s32.totalorder %s66, %s68
      %p75 = scmp.eq.s32.totalorder %s16, 1
      %p76 = por %p74, %p75
      %p77 = scmp.ne.s32.totalorder %s68, %s69
      %p78 = scmp.eq.s32.totalorder %s16, 0
      %p79 = por %p77, %p78
      %p80 = scmp.ne.s32.totalorder %s68, %s69
      %p81 = scmp.eq.s32.totalorder %s17, 1
      %p82 = por %p80, %p81
      %p84 = scmp.ne.s32.totalorder %s69, %s83
      %p85 = scmp.eq.s32.totalorder %s17, 0
      %p86 = por %p84, %p85
      %s88 = sadd.s32 %s87, 1
      %p91 = scmp.eq.s32.totalorder %s11, 1
      %p92 = scmp.ne.s32.totalorder %s87, %s89
      %p93 = scmp.eq.s32.totalorder %s11, 0
      %p94 = por %p92, %p93
      %p95 = scmp.ne.s32.totalorder %s87, %s89
      %p96 = scmp.eq.s32.totalorder %s16, 1
      %p97 = por %p95, %p96
      %p98 = scmp.ne.s32.totalorder %s89, %s90
      %p99 = scmp.eq.s32.totalorder %s16, 0
      %p100 = por %p98, %p99
      %p101 = scmp.ne.s32.totalorder %s89, %s90
      %p102 = scmp.eq.s32.totalorder %s17, 1
      %p103 = por %p101, %p102
      %p105 = scmp.ne.s32.totalorder %s90, %s104
      %p106 = scmp.eq.s32.totalorder %s17, 0
      %p107 = por %p105, %p106
      %s108 = ssub.s32 %s11, %s18
      %p109 = scmp.eq.s32.totalorder %s108, 0
      %s111 = sadd.s32 %s110, 1
      %s112 = scalar_select %p109, %s110, %s111
      %p115 = pneg %p109
      %p116 = scmp.eq.s32.totalorder %s11, 1
      %p117 = por %p115, %p116
      %p118 = scmp.ne.s32.totalorder %s110, %s113
      %p119 = scmp.eq.s32.totalorder %s11, 0
      %p120 = por %p118, %p119
      %p121 = scmp.ne.s32.totalorder %s110, %s113
      %p122 = scmp.eq.s32.totalorder %s16, 1
      %p123 = por %p121, %p122
      %p124 = scmp.ne.s32.totalorder %s113, %s114
      %p125 = scmp.eq.s32.totalorder %s16, 0
      %p126 = por %p124, %p125
      %p127 = scmp.ne.s32.totalorder %s113, %s114
      %p128 = scmp.eq.s32.totalorder %s17, 1
      %p129 = por %p127, %p128
      %p131 = scmp.ne.s32.totalorder %s114, %s130
      %p132 = scmp.eq.s32.totalorder %s17, 0
      %p133 = por %p131, %p132
      %p134 = scmp.le.s32.totalorder 1, %s11
      %p135 = scmp.lt.s32.totalorder %s11, 3
      %p136 = pnand %p134, %p135
      %p137 = pneg %p136
      // Predicated region
      $region9: #{fully_connected_multi_output.1} parent=5 // pred_check
        _
      $region10: #{fully_connected_multi_output.1} parent=5 // pred_check_branch
        %139 = sbr.rel (%p136) target = $region12
      $region11: #{fully_connected_multi_output.1} parent=5 // pred_region
        %s140 = ssub.s32 %s11, 1
        // Predicated region
        $region13: #{fully_connected_multi_output.1} parent=11 // pred_check
          %p141 = pneg %p58
        $region14: #{fully_connected_multi_output.1} parent=11 // pred_check_branch
          %143 = sbr.rel (%p141) target = $region16
        $region15: #{fully_connected_multi_output.1} parent=11 // pred_region
          _
        $region16: #{fully_connected_multi_output.1} parent=11 // pred_fallthru
          _
        // Predicated region
        $region17: #{fully_connected_multi_output.1} parent=11 // pred_check
          %p144 = pneg %p79
        $region18: #{fully_connected_multi_output.1} parent=11 // pred_check_branch
          %146 = sbr.rel (%p144) target = $region20
        $region19: #{fully_connected_multi_output.1} parent=11 // pred_region
          %s148 = ssub.s32 3072, 3072
          %149 = vsyncadd [#allocation3], %s148
          %s150 = sshll.u32 [#allocation2], 4
          %s151 = int_to_ptr.vmem [resolvable:$true] %s150
          %156 = dma.hbm_to_vmem [thread:$0]  %s2, 3072, %s151, [#allocation3], 64, 64, 4
        $region20: #{fully_connected_multi_output.1} parent=11 // pred_fallthru
          _
        // Predicated region
        $region21: #{fully_connected_multi_output.1} parent=11 // pred_check
          %p157 = pneg %p100
        $region22: #{fully_connected_multi_output.1} parent=11 // pred_check_branch
          %159 = sbr.rel (%p157) target = $region24
        $region23: #{fully_connected_multi_output.1} parent=11 // pred_region
          _
        $region24: #{fully_connected_multi_output.1} parent=11 // pred_fallthru
          _
      $region12: #{fully_connected_multi_output.1} parent=5 // pred_fallthru
        _
      %p160 = scmp.lt.s32.totalorder %s11, 2
      // Predicated region
      $region25: #{fully_connected_multi_output.1} parent=5 // pred_check
        %p161 = pneg %p160
      $region26: #{fully_connected_multi_output.1} parent=5 // pred_check_branch
        %163 = sbr.rel (%p161) target = $region28
      $region27: #{fully_connected_multi_output.1} parent=5 // pred_region
        // Predicated region
        $region29: #{fully_connected_multi_output.1} parent=27 // pred_check
          %p164 = pneg %p31
        $region30: #{fully_connected_multi_output.1} parent=27 // pred_check_branch
          %166 = sbr.rel (%p164) target = $region32
        $region31: #{fully_connected_multi_output.1} parent=27 // pred_region
          %s167 = smul.u32 2, %s11
          %p168 = scmp.lt.s32.totalorder %s167, 3
          %s169 = scalar_select %p168, %s167, 3
          %s170 = smul.addr %s169, 4
          %s171 = scalar_lea.vmem %s0, %s170
          %s172 = smul.u32 2, %s11
        $region32: #{fully_connected_multi_output.1} parent=27 // pred_fallthru
          _
      $region28: #{fully_connected_multi_output.1} parent=5 // pred_fallthru
        _
      %p173 = scmp.le.s32.totalorder 1, %s11
      %p174 = scmp.lt.s32.totalorder %s11, 3
      %p175 = pnand %p173, %p174
      %p176 = pneg %p175
      // Predicated region
      $region33: #{fully_connected_multi_output.1} parent=5 // pred_check
        _
      $region34: #{fully_connected_multi_output.1} parent=5 // pred_check_branch
        %178 = sbr.rel (%p175) target = $region36
      $region35: #{fully_connected_multi_output.1} parent=5 // pred_region
        %s179 = ssub.s32 %s11, 1
        // Predicated region
        $region37: #{fully_connected_multi_output.1} parent=35 // pred_check
          %p180 = pneg %p79
        $region38: #{fully_connected_multi_output.1} parent=35 // pred_check_branch
          %182 = sbr.rel (%p180) target = $region40
        $region39: #{fully_connected_multi_output.1} parent=35 // pred_region
          %183 = dma.done [#allocation3], 3072
        $region40: #{fully_connected_multi_output.1} parent=35 // pred_fallthru
          _
        %s184 = smul.u32 2, %s16
        %p185 = scmp.lt.s32.totalorder %s184, 3
        %s186 = scalar_select %p185, %s184, 3
        %s187 = smul.addr %s186, 4
        %s188 = scalar_lea.vmem %s0, %s187
        %p189 = pneg %p37
        %p190 = pneg %p34
        %p191 = pneg %p58
        %p192 = pneg %p55
        %p193 = pneg %p79
        %p194 = pneg %p76
        %p195 = pneg %p100
        %p196 = pneg %p97
        %p197 = pneg %p126
        %p198 = pneg %p123
        %s199 = smul.u32 2, %s16
        %p200 = scmp.lt.s32.totalorder %s199, 3
        %s201 = scalar_select %p200, %s199, 3
        %s202 = smul.addr %s201, 4
        %s203 = scalar_lea.vmem %s4, %s202
        %s204 = smul.u32 2, %s16
        %p205 = scmp.lt.s32.totalorder %s204, 3
        %s206 = scalar_select %p205, %s204, 3
        %s207 = smul.addr %s206, 4
        %s208 = scalar_lea.vmem %s0, %s207
        %s209 = smul.u32 2, %s16
        %s210 = smul.u32 2, %s16
        %p211 = scmp.lt.s32.totalorder %s210, 3
        %s212 = scalar_select %p211, %s210, 3
        %s213 = smul.addr %s212, 4
        %s214 = scalar_lea.vmem %s4, %s213
        %s215 = smul.u32 2, %s16
        %v217 = vld [vmem:[%s208] sm:$0xf]
        %v218 = vld [vmem:[%s208 + $0x4] sm:$0xf]
        %v219 = vld [vmem:[%s1] sm:$0xf]
        %v220 = vld [vmem:[%s1 + $0x4] sm:$0xf]
        %v221 = vld [vmem:[%s3] sm:$0x1]
        %v222 = vlaneseq
        %v223 = vshrl.u32 %v222, 7
        %v224 = vsub.s32 0, %v223
        %v225 = vrot.slane %v221, %v224
        %v228 = vunpack.c.l.b16 %v217
        %v229 = vunpack.c.l.b16 %v218
        %v230 = vpack.c.b16 %v229, %v228
        %v233 = vunpack.c.l.b16 %v219
        %v234 = vunpack.c.l.b16 %v220
        %v235 = vpack.c.b16 %v234, %v233
        %vm237 = vcmask 130048
        %v239 = vsel %vm237, %v230, 0
        %241 = vmatprep.subr.bf16.mxu0 0
        %242 = vmatpush1.bf16.msra.mxu0 %v235
        %243 = vmatprep.subr.bf16.mxu0 0
        %244 = vmatpush1.bf16.msra.mxu0 0
        %245 = vmatprep.subr.bf16.mxu0 0
        %246 = vmatpush1.bf16.msra.mxu0 0
        %247 = vmatprep.subr.bf16.mxu0 0
        %248 = vmatpush1.bf16.msra.mxu0 0
        %249 = vmatprep.subr.bf16.mxu0 0
        %250 = vmatpush1.bf16.msra.mxu0 0
        %251 = vmatprep.subr.bf16.mxu0 0
        %252 = vmatpush1.bf16.msra.mxu0 0
        %253 = vmatprep.subr.bf16.mxu0 0
        %254 = vmatpush1.bf16.msra.mxu0 0
        %255 = vmatprep.subr.bf16.mxu0 0
        %256 = vmatpush1.bf16.msra.mxu0 0
        %257 = vmatprep.subr.bf16.mxu0 0
        %258 = vmatpush1.bf16.msra.mxu0 0
        %259 = vmatprep.subr.bf16.mxu0 0
        %260 = vmatpush1.bf16.msra.mxu0 0
        %261 = vmatprep.subr.bf16.mxu0 0
        %262 = vmatpush1.bf16.msra.mxu0 0
        %263 = vmatprep.subr.bf16.mxu0 0
        %264 = vmatpush1.bf16.msra.mxu0 0
        %265 = vmatprep.subr.bf16.mxu0 0
        %266 = vmatpush1.bf16.msra.mxu0 0
        %267 = vmatprep.subr.bf16.mxu0 0
        %268 = vmatpush1.bf16.msra.mxu0 0
        %269 = vmatprep.subr.bf16.mxu0 0
        %270 = vmatpush1.bf16.msra.mxu0 0
        %271 = vmatprep.subr.bf16.mxu0 0
        %272 = vmatpush1.bf16.msra.mxu0 0
        %273 = vmatprep.mubr.bf16.mxu0 0
        %274 = vmatmul.mubr.bf16.gmra.mrb[0].mxu0 %v239
        %v275 = vpop.f32.mrb[0].mxu0
        %v276 = vadd.f32 %v225, %v275
        %v277 = vpop.f32.mrb[0].mxu0
        %v278 = vpop.f32.mrb[0].mxu0
        %v279 = vadd.f32 %v225, %v278
        %v280 = vpop.f32.mrb[0].mxu0
        %281 = vdwg.mxu0
        %v282 = vmax.f32 %v276, 0.0
        %v283 = vmax.f32 %v279, 0.0
        %v284 = vpack.c.bf16 %v283, %v282
        %v285 = vld [vmem:[#allocation2] sm:$0xf]
        %v286 = vld [vmem:[#allocation2 + $0x4] sm:$0xf]
        %v287 = vld [vmem:[#allocation2 + $0x8] sm:$0xf]
        %v288 = vld [vmem:[#allocation2 + $0xc] sm:$0xf]
        %v289 = vld [vmem:[#allocation2 + $0x10] sm:$0xf]
        %v290 = vld [vmem:[#allocation2 + $0x14] sm:$0xf]
        %v291 = vld [vmem:[#allocation2 + $0x18] sm:$0xf]
        %v292 = vld [vmem:[#allocation2 + $0x1c] sm:$0xf]
        %v293 = vld [vmem:[#allocation2 + $0x20] sm:$0xf]
        %v294 = vld [vmem:[#allocation2 + $0x24] sm:$0xf]
        %v295 = vld [vmem:[#allocation2 + $0x28] sm:$0xf]
        %v296 = vld [vmem:[#allocation2 + $0x2c] sm:$0xf]
        %v297 = vld [vmem:[#allocation2 + $0x30] sm:$0xf]
        %v298 = vld [vmem:[#allocation2 + $0x34] sm:$0xf]
        %v299 = vld [vmem:[#allocation2 + $0x38] sm:$0xf]
        %v300 = vld [vmem:[#allocation2 + $0x3c] sm:$0xf]
        %v301 = vld [vmem:[%s3 + $0x1] sm:$0x1]
        %v302 = vlaneseq
        %v303 = vshrl.u32 %v302, 7
        %v304 = vsub.s32 0, %v303
        %v305 = vrot.slane %v301, %v304
        %v322 = vunpack.c.l.b16 %v285
        %v323 = vunpack.c.l.b16 %v286
        %v324 = vunpack.c.l.b16 %v287
        %v325 = vunpack.c.l.b16 %v288
        %v326 = vunpack.c.l.b16 %v289
        %v327 = vunpack.c.l.b16 %v290
        %v328 = vunpack.c.l.b16 %v291
        %v329 = vunpack.c.l.b16 %v292
        %v330 = vunpack.c.l.b16 %v293
        %v331 = vunpack.c.l.b16 %v294
        %v332 = vunpack.c.l.b16 %v295
        %v333 = vunpack.c.l.b16 %v296
        %v334 = vunpack.c.l.b16 %v297
        %v335 = vunpack.c.l.b16 %v298
        %v336 = vunpack.c.l.b16 %v299
        %v337 = vunpack.c.l.b16 %v300
        %v338 = vpack.c.b16 %v323, %v322
        %v339 = vpack.c.b16 %v325, %v324
        %v340 = vpack.c.b16 %v327, %v326
        %v341 = vpack.c.b16 %v329, %v328
        %v342 = vpack.c.b16 %v331, %v330
        %v343 = vpack.c.b16 %v333, %v332
        %v344 = vpack.c.b16 %v335, %v334
        %v345 = vpack.c.b16 %v337, %v336
        %354 = vmatprep.subr.bf16.mxu0 0
        %355 = vmatpush1.bf16.msra.mxu0 %v338
        %356 = vmatprep.subr.bf16.mxu0 0
        %357 = vmatpush1.bf16.msra.mxu0 %v339
        %358 = vmatprep.subr.bf16.mxu0 0
        %359 = vmatpush1.bf16.msra.mxu0 %v340
        %360 = vmatprep.subr.bf16.mxu0 0
        %361 = vmatpush1.bf16.msra.mxu0 %v341
        %362 = vmatprep.subr.bf16.mxu0 0
        %363 = vmatpush1.bf16.msra.mxu0 %v342
        %364 = vmatprep.subr.bf16.mxu0 0
        %365 = vmatpush1.bf16.msra.mxu0 %v343
        %366 = vmatprep.subr.bf16.mxu0 0
        %367 = vmatpush1.bf16.msra.mxu0 %v344
        %368 = vmatprep.subr.bf16.mxu0 0
        %369 = vmatpush1.bf16.msra.mxu0 %v345
        %370 = vmatprep.subr.bf16.mxu0 0
        %371 = vmatpush1.bf16.msra.mxu0 0
        %372 = vmatprep.subr.bf16.mxu0 0
        %373 = vmatpush1.bf16.msra.mxu0 0
        %374 = vmatprep.subr.bf16.mxu0 0
        %375 = vmatpush1.bf16.msra.mxu0 0
        %376 = vmatprep.subr.bf16.mxu0 0
        %377 = vmatpush1.bf16.msra.mxu0 0
        %378 = vmatprep.subr.bf16.mxu0 0
        %379 = vmatpush1.bf16.msra.mxu0 0
        %380 = vmatprep.subr.bf16.mxu0 0
        %381 = vmatpush1.bf16.msra.mxu0 0
        %382 = vmatprep.subr.bf16.mxu0 0
        %383 = vmatpush1.bf16.msra.mxu0 0
        %384 = vmatprep.subr.bf16.mxu0 0
        %385 = vmatpush1.bf16.msra.mxu0 0
        %386 = vmatprep.mubr.bf16.mxu0 0
        %387 = vmatmul.mubr.bf16.gmra.mrb[0].mxu0 %v284
        %v388 = vpop.f32.mrb[0].mxu0
        %v389 = vadd.f32 %v305, %v388
        %v390 = vpop.f32.mrb[0].mxu0
        %v391 = vpop.f32.mrb[0].mxu0
        %v392 = vadd.f32 %v305, %v391
        %v393 = vpop.f32.mrb[0].mxu0
        %394 = vdwg.mxu0
        %v395 = vmax.f32 %v389, 0.0
        %v396 = vmax.f32 %v392, 0.0
        %v397 = vpack.c.bf16 %v396, %v395
        %s398 = scalar_lea.vmem [#allocation2], 64
        %v399 = vld [vmem:[%s398] sm:$0xf]
        %v400 = vld [vmem:[%s398 + $0x4] sm:$0xf]
        %v401 = vld [vmem:[%s398 + $0x8] sm:$0xf]
        %v402 = vld [vmem:[%s398 + $0xc] sm:$0xf]
        %v403 = vld [vmem:[%s398 + $0x10] sm:$0xf]
        %v404 = vld [vmem:[%s398 + $0x14] sm:$0xf]
        %v405 = vld [vmem:[%s398 + $0x18] sm:$0xf]
        %v406 = vld [vmem:[%s398 + $0x1c] sm:$0xf]
        %v407 = vld [vmem:[%s398 + $0x20] sm:$0xf]
        %v408 = vld [vmem:[%s398 + $0x24] sm:$0xf]
        %v409 = vld [vmem:[%s398 + $0x28] sm:$0xf]
        %v410 = vld [vmem:[%s398 + $0x2c] sm:$0xf]
        %v411 = vld [vmem:[%s398 + $0x30] sm:$0xf]
        %v412 = vld [vmem:[%s398 + $0x34] sm:$0xf]
        %v413 = vld [vmem:[%s398 + $0x38] sm:$0xf]
        %v414 = vld [vmem:[%s398 + $0x3c] sm:$0xf]
        %v415 = vld [vmem:[%s3 + $0x2] sm:$0x1]
        %v416 = vlaneseq
        %v417 = vshrl.u32 %v416, 7
        %v418 = vsub.s32 0, %v417
        %v419 = vrot.slane %v415, %v418
        %v436 = vunpack.c.l.b16 %v399
        %v437 = vunpack.c.l.b16 %v400
        %v438 = vunpack.c.l.b16 %v401
        %v439 = vunpack.c.l.b16 %v402
        %v440 = vunpack.c.l.b16 %v403
        %v441 = vunpack.c.l.b16 %v404
        %v442 = vunpack.c.l.b16 %v405
        %v443 = vunpack.c.l.b16 %v406
        %v444 = vunpack.c.l.b16 %v407
        %v445 = vunpack.c.l.b16 %v408
        %v446 = vunpack.c.l.b16 %v409
        %v447 = vunpack.c.l.b16 %v410
        %v448 = vunpack.c.l.b16 %v411
        %v449 = vunpack.c.l.b16 %v412
        %v450 = vunpack.c.l.b16 %v413
        %v451 = vunpack.c.l.b16 %v414
        %v452 = vpack.c.b16 %v437, %v436
        %v453 = vpack.c.b16 %v439, %v438
        %v454 = vpack.c.b16 %v441, %v440
        %v455 = vpack.c.b16 %v443, %v442
        %v456 = vpack.c.b16 %v445, %v444
        %v457 = vpack.c.b16 %v447, %v446
        %v458 = vpack.c.b16 %v449, %v448
        %v459 = vpack.c.b16 %v451, %v450
        %468 = vmatprep.subr.bf16.mxu0 0
        %469 = vmatpush1.bf16.msra.mxu0 %v452
        %470 = vmatprep.subr.bf16.mxu0 0
        %471 = vmatpush1.bf16.msra.mxu0 %v453
        %472 = vmatprep.subr.bf16.mxu0 0
        %473 = vmatpush1.bf16.msra.mxu0 %v454
        %474 = vmatprep.subr.bf16.mxu0 0
        %475 = vmatpush1.bf16.msra.mxu0 %v455
        %476 = vmatprep.subr.bf16.mxu0 0
        %477 = vmatpush1.bf16.msra.mxu0 %v456
        %478 = vmatprep.subr.bf16.mxu0 0
        %479 = vmatpush1.bf16.msra.mxu0 %v457
        %480 = vmatprep.subr.bf16.mxu0 0
        %481 = vmatpush1.bf16.msra.mxu0 %v458
        %482 = vmatprep.subr.bf16.mxu0 0
        %483 = vmatpush1.bf16.msra.mxu0 %v459
        %484 = vmatprep.subr.bf16.mxu0 0
        %485 = vmatpush1.bf16.msra.mxu0 0
        %486 = vmatprep.subr.bf16.mxu0 0
        %487 = vmatpush1.bf16.msra.mxu0 0
        %488 = vmatprep.subr.bf16.mxu0 0
        %489 = vmatpush1.bf16.msra.mxu0 0
        %490 = vmatprep.subr.bf16.mxu0 0
        %491 = vmatpush1.bf16.msra.mxu0 0
        %492 = vmatprep.subr.bf16.mxu0 0
        %493 = vmatpush1.bf16.msra.mxu0 0
        %494 = vmatprep.subr.bf16.mxu0 0
        %495 = vmatpush1.bf16.msra.mxu0 0
        %496 = vmatprep.subr.bf16.mxu0 0
        %497 = vmatpush1.bf16.msra.mxu0 0
        %498 = vmatprep.subr.bf16.mxu0 0
        %499 = vmatpush1.bf16.msra.mxu0 0
        %500 = vmatprep.mubr.bf16.mxu0 0
        %501 = vmatmul.mubr.bf16.gmra.mrb[0].mxu0 %v397
        %v502 = vpop.f32.mrb[0].mxu0
        %v503 = vadd.f32 %v419, %v502
        %v504 = vpop.f32.mrb[0].mxu0
        %v505 = vpop.f32.mrb[0].mxu0
        %v506 = vadd.f32 %v419, %v505
        %v507 = vpop.f32.mrb[0].mxu0
        %508 = vdwg.mxu0
        %v509 = vmax.f32 %v503, 0.0
        %v510 = vmax.f32 %v506, 0.0
        %v511 = vpack.c.bf16 %v510, %v509
        %s512 = scalar_lea.vmem [#allocation2], 128
        %v513 = vld [vmem:[%s512] sm:$0xf]
        %v514 = vld [vmem:[%s512 + $0x4] sm:$0xf]
        %v515 = vld [vmem:[%s512 + $0x8] sm:$0xf]
        %v516 = vld [vmem:[%s512 + $0xc] sm:$0xf]
        %v517 = vld [vmem:[%s512 + $0x10] sm:$0xf]
        %v518 = vld [vmem:[%s512 + $0x14] sm:$0xf]
        %v519 = vld [vmem:[%s512 + $0x18] sm:$0xf]
        %v520 = vld [vmem:[%s512 + $0x1c] sm:$0xf]
        %v521 = vld [vmem:[%s512 + $0x20] sm:$0xf]
        %v522 = vld [vmem:[%s512 + $0x24] sm:$0xf]
        %v523 = vld [vmem:[%s512 + $0x28] sm:$0xf]
        %v524 = vld [vmem:[%s512 + $0x2c] sm:$0xf]
        %v525 = vld [vmem:[%s512 + $0x30] sm:$0xf]
        %v526 = vld [vmem:[%s512 + $0x34] sm:$0xf]
        %v527 = vld [vmem:[%s512 + $0x38] sm:$0xf]
        %v528 = vld [vmem:[%s512 + $0x3c] sm:$0xf]
        %v529 = vld [vmem:[%s3 + $0x3] sm:$0x1]
        %v530 = vlaneseq
        %v531 = vshrl.u32 %v530, 7
        %v532 = vsub.s32 0, %v531
        %v533 = vrot.slane %v529, %v532
        %v550 = vunpack.c.l.b16 %v513
        %v551 = vunpack.c.l.b16 %v514
        %v552 = vunpack.c.l.b16 %v515
        %v553 = vunpack.c.l.b16 %v516
        %v554 = vunpack.c.l.b16 %v517
        %v555 = vunpack.c.l.b16 %v518
        %v556 = vunpack.c.l.b16 %v519
        %v557 = vunpack.c.l.b16 %v520
        %v558 = vunpack.c.l.b16 %v521
        %v559 = vunpack.c.l.b16 %v522
        %v560 = vunpack.c.l.b16 %v523
        %v561 = vunpack.c.l.b16 %v524
        %v562 = vunpack.c.l.b16 %v525
        %v563 = vunpack.c.l.b16 %v526
        %v564 = vunpack.c.l.b16 %v527
        %v565 = vunpack.c.l.b16 %v528
        %v566 = vpack.c.b16 %v551, %v550
        %v567 = vpack.c.b16 %v553, %v552
        %v568 = vpack.c.b16 %v555, %v554
        %v569 = vpack.c.b16 %v557, %v556
        %v570 = vpack.c.b16 %v559, %v558
        %v571 = vpack.c.b16 %v561, %v560
        %v572 = vpack.c.b16 %v563, %v562
        %v573 = vpack.c.b16 %v565, %v564
        %582 = vmatprep.subr.bf16.mxu0 0
        %583 = vmatpush1.bf16.msra.mxu0 %v566
        %584 = vmatprep.subr.bf16.mxu0 0
        %585 = vmatpush1.bf16.msra.mxu0 %v567
        %586 = vmatprep.subr.bf16.mxu0 0
        %587 = vmatpush1.bf16.msra.mxu0 %v568
        %588 = vmatprep.subr.bf16.mxu0 0
        %589 = vmatpush1.bf16.msra.mxu0 %v569
        %590 = vmatprep.subr.bf16.mxu0 0
        %591 = vmatpush1.bf16.msra.mxu0 %v570
        %592 = vmatprep.subr.bf16.mxu0 0
        %593 = vmatpush1.bf16.msra.mxu0 %v571
        %594 = vmatprep.subr.bf16.mxu0 0
        %595 = vmatpush1.bf16.msra.mxu0 %v572
        %596 = vmatprep.subr.bf16.mxu0 0
        %597 = vmatpush1.bf16.msra.mxu0 %v573
        %598 = vmatprep.subr.bf16.mxu0 0
        %599 = vmatpush1.bf16.msra.mxu0 0
        %600 = vmatprep.subr.bf16.mxu0 0
        %601 = vmatpush1.bf16.msra.mxu0 0
        %602 = vmatprep.subr.bf16.mxu0 0
        %603 = vmatpush1.bf16.msra.mxu0 0
        %604 = vmatprep.subr.bf16.mxu0 0
        %605 = vmatpush1.bf16.msra.mxu0 0
        %606 = vmatprep.subr.bf16.mxu0 0
        %607 = vmatpush1.bf16.msra.mxu0 0
        %608 = vmatprep.subr.bf16.mxu0 0
        %609 = vmatpush1.bf16.msra.mxu0 0
        %610 = vmatprep.subr.bf16.mxu0 0
        %611 = vmatpush1.bf16.msra.mxu0 0
        %612 = vmatprep.subr.bf16.mxu0 0
        %613 = vmatpush1.bf16.msra.mxu0 0
        %614 = vmatprep.mubr.bf16.mxu0 0
        %615 = vmatmul.mubr.bf16.gmra.mrb[0].mxu0 %v511
        %v616 = vpop.f32.mrb[0].mxu0
        %v617 = vadd.f32 %v533, %v616
        %v618 = vpop.f32.mrb[0].mxu0
        %v619 = vpop.f32.mrb[0].mxu0
        %v620 = vadd.f32 %v533, %v619
        %v621 = vpop.f32.mrb[0].mxu0
        %622 = vdwg.mxu0
        %v623 = vpack.c.bf16 %v620, %v617
        %v625 = vunpack.c.l.b16 %v623
        %v626 = vunpack.c.h.b16 %v623
        %v627 = vpack.c.b16 %v625, %v625
        %v628 = vpack.c.b16 %v626, %v626
        %631 = vst [vmem:[%s214] sm:$0xf] %v627
        %632 = vst [vmem:[%s214 + $0x4] sm:$0xf] %v628
        %s633 = smul.u32 2, %s16
        %p634 = scmp.lt.s32.totalorder %s633, 3
        %s635 = scalar_select %p634, %s633, 3
        %s636 = smul.addr %s635, 4
        %s637 = scalar_lea.vmem %s4, %s636
        // Predicated region
        $region41: #{fully_connected_multi_output.1} parent=35 // pred_check
          %p638 = pneg %p123
        $region42: #{fully_connected_multi_output.1} parent=35 // pred_check_branch
          %640 = sbr.rel (%p638) target = $region44
        $region43: #{fully_connected_multi_output.1} parent=35 // pred_region
          %s641 = smul.u32 2, %s16
        $region44: #{fully_connected_multi_output.1} parent=35 // pred_fallthru
          _
      $region36: #{fully_connected_multi_output.1} parent=5 // pred_fallthru
        _
      %p642 = scmp.le.s32.totalorder 2, %s11
      // Predicated region
      $region45: #{fully_connected_multi_output.1} parent=5 // pred_check
        %p643 = pneg %p642
      $region46: #{fully_connected_multi_output.1} parent=5 // pred_check_branch
        %645 = sbr.rel (%p643) target = $region48
      $region47: #{fully_connected_multi_output.1} parent=5 // pred_region
        %s646 = ssub.s32 %s11, 2
        // Predicated region
        $region49: #{fully_connected_multi_output.1} parent=47 // pred_check
          %p647 = pneg %p129
        $region50: #{fully_connected_multi_output.1} parent=47 // pred_check_branch
          %649 = sbr.rel (%p647) target = $region52
        $region51: #{fully_connected_multi_output.1} parent=47 // pred_region
          %s650 = smul.u32 2, %s17
          %p651 = scmp.lt.s32.totalorder %s650, 3
          %s652 = scalar_select %p651, %s650, 3
          %s653 = smul.addr %s652, 4
          %s654 = scalar_lea.vmem %s4, %s653
        $region52: #{fully_connected_multi_output.1} parent=47 // pred_fallthru
          _
      $region48: #{fully_connected_multi_output.1} parent=5 // pred_fallthru
        _
    $region6: #{fully_connected_multi_output.1} parent=1 // loop_footer
      %s15 = sadd.s32 1, %s11
    $region7: #{fully_connected_multi_output.1} parent=1 // loop_footer_branch
      %10 = sbr.rel target = $region3
    $region8: #{fully_connected_multi_output.1} parent=1 // loop_exit
      _
    %655 = vsyncpa [#allocation3], 1
    %s656 = scalar_lea.sflag [#allocation3], 1
    %657 = vsyncpa %s656, 1

</llo_original>
